<compile_context>
chip_gen: v5e
topology: v5e:2x2
jax: 0.10.0
libtpu: 0.0.40
codegen_flags: <defaults>
</compile_context>

<pallas_src>
import math
from functools import partial

import jax
import jax.numpy as jnp
from jax.experimental import pallas as pl
from jax.experimental.pallas import tpu as pltpu


def _pick_tile(dim, candidates):
    """Largest candidate that divides dim, else the full dim (single block)."""
    for c in candidates:
        if c <= dim and dim % c == 0:
            return c
    return dim
    # TODO(synk): pad awkward (non-tile-divisible) dims instead of falling back
    # to one giant block.


# ---------------------------------------------------------------------------
# Phase 1 / 3: tiled linear layer  (x @ W + b), rows x N x K grid
# ---------------------------------------------------------------------------
def _linear_kernel(x_ref, w_ref, b_ref, o_ref, acc_ref):
    # x_ref: (TM, TK) bf16  w_ref: (TK, TN) bf16  b_ref: (1, TN) f32
    # o_ref: (TM, TN)       acc_ref: (TM, TN) f32 scratch
    k = pl.program_id(2)

    @pl.when(k == 0)
    def _init():
        acc_ref[...] = jnp.zeros_like(acc_ref)

    acc_ref[...] += jnp.dot(x_ref[...], w_ref[...],
                            preferred_element_type=jnp.float32)

    @pl.when(k == pl.num_programs(2) - 1)
    def _finalize():
        o_ref[...] = (acc_ref[...] + b_ref[...]).astype(o_ref.dtype)


def _linear(x, w, b, out_dtype):
    """x: (M, K) bf16, w: (K, N) bf16, b: (1, N) f32 -> (M, N) out_dtype."""
    M, K = x.shape
    N = w.shape[1]
    TM = _pick_tile(M, (512, 256, 128))
    TN = _pick_tile(N, (512, 256, 128))
    TK = _pick_tile(K, (512, 256, 128))
    grid = (M // TM, N // TN, K // TK)
    return pl.pallas_call(
        _linear_kernel,
        out_shape=jax.ShapeDtypeStruct((M, N), out_dtype),
        grid_spec=pltpu.PrefetchScalarGridSpec(
            num_scalar_prefetch=0,
            grid=grid,
            in_specs=[
                pl.BlockSpec((TM, TK), lambda r, n, k: (r, k)),
                pl.BlockSpec((TK, TN), lambda r, n, k: (k, n)),
                pl.BlockSpec((1, TN), lambda r, n, k: (0, n)),
            ],
            out_specs=pl.BlockSpec((TM, TN), lambda r, n, k: (r, n)),
            scratch_shapes=[pltpu.VMEM((TM, TN), jnp.float32)],
        ),
        compiler_params=pltpu.CompilerParams(
            dimension_semantics=("parallel", "parallel", "arbitrary"),
            vmem_limit_bytes=32 * 1024 * 1024,
        ),
    )(x, w, b)


# ---------------------------------------------------------------------------
# Phase 2: flash-style causal attention driven by a lower-triangular work list
# ---------------------------------------------------------------------------
def _causal_worklist(T, tq, tkv):
    """Lower-triangular (q_tile, kv_tile) pairs plus per-pair flags."""
    nq, nkv = T // tq, T // tkv
    qi_l, kv_l, last_l, mask_l = [], [], [], []
    for qi in range(nq):
        hi = min(((qi + 1) * tq - 1) // tkv, nkv - 1)   # last kv tile for qi
        for kv in range(hi + 1):
            qi_l.append(qi)
            kv_l.append(kv)
            last_l.append(1 if kv == hi else 0)
            # Tile straddles the diagonal -> needs masking.
            mask_l.append(1 if kv * tkv + tkv - 1 > qi * tq else 0)
    to = lambda lst: jnp.asarray(lst, dtype=jnp.int32)
    return to(qi_l), to(kv_l), to(last_l), to(mask_l)


def _flash_kernel(qi_ids, kv_ids, last_flag, mask_flag,
                  q_ref, k_ref, v_ref, o_ref,
                  m_sc, l_sc, acc_sc, *, tq, tkv, scale):
    # q_ref: (TQ, D) bf16   k_ref / v_ref: (TKV, D) bf16   o_ref: (TQ, D)
    # scratch: m (TQ,1) f32, l (TQ,1) f32, acc (TQ,D) f32
    t = pl.program_id(2)
    qi = qi_ids[t]
    kv = kv_ids[t]

    @pl.when(kv == 0)
    def _init():
        m_sc[...] = jnp.full_like(m_sc, -jnp.inf)
        l_sc[...] = jnp.zeros_like(l_sc)
        acc_sc[...] = jnp.zeros_like(acc_sc)

    # Scale applied to q (TQ*D elems once per pair) instead of the score tile.
    q = q_ref[...] * scale
    k = k_ref[...]
    v = v_ref[...]

    # q @ k^T with no explicit transpose (contract last dims on the MXU).
    s = jax.lax.dot_general(q, k, (((1,), (1,)), ((), ())),
                            preferred_element_type=jnp.float32)   # (TQ, TKV)

    def _accumulate(scores):
        m_prev = m_sc[...]
        m_new = jnp.maximum(m_prev, jnp.max(scores, axis=-1, keepdims=True))
        alpha = jnp.exp(m_prev - m_new)
        p = jnp.exp(scores - m_new)                               # unnormalized
        l_sc[...] = alpha * l_sc[...] + jnp.sum(p, axis=-1, keepdims=True)
        acc_sc[...] = alpha * acc_sc[...] + jax.lax.dot_general(
            p.astype(v.dtype), v, (((1,), (0,)), ((), ())),
            preferred_element_type=jnp.float32)
        m_sc[...] = m_new

    # Only tiles straddling the diagonal pay the iota/compare/where mask cost.
    @pl.when(mask_flag[t] == 1)
    def _diag_tile():
        row = qi * tq + jax.lax.broadcasted_iota(jnp.int32, s.shape, 0)
        col = kv * tkv + jax.lax.broadcasted_iota(jnp.int32, s.shape, 1)
        _accumulate(jnp.where(row >= col, s, jnp.float32(-1e30)))

    @pl.when(mask_flag[t] == 0)
    def _full_tile():
        _accumulate(s)

    @pl.when(last_flag[t] == 1)
    def _finalize():
        inv_l = pl.reciprocal(l_sc[...], approx=True)   # EUP slot
        o_ref[...] = (acc_sc[...] * inv_l).astype(o_ref.dtype)


def _flash_common(tq, tkv, D, scale):
    kernel = partial(_flash_kernel, tq=tq, tkv=tkv, scale=scale)
    scratch = [
        pltpu.VMEM((tq, 1), jnp.float32),   # running max m
        pltpu.VMEM((tq, 1), jnp.float32),   # running sum l
        pltpu.VMEM((tq, D), jnp.float32),   # output accumulator
    ]
    cparams = pltpu.CompilerParams(
        dimension_semantics=("parallel", "parallel", "arbitrary"),
        vmem_limit_bytes=32 * 1024 * 1024,
    )
    return kernel, scratch, cparams


def _flash_attention_fused(qkv, n_head, tq, tkv):
    """Lane-aligned fast path: qkv (B, T, 3C) bf16 -> y (B, T, C) bf16.

    Requires D = C / n_head to be a multiple of 128 so the last-axis head
    slices are lane-dense blocks.  No head-split transposes anywhere.
    """
    B, T, threeC = qkv.shape
    C = threeC // 3
    H = n_head
    D = C // H
    qi_ids, kv_ids, last_flag, mask_flag = _causal_worklist(T, tq, tkv)
    n_pairs = int(qi_ids.shape[0])
    kernel, scratch, cparams = _flash_common(tq, tkv, D, 1.0 / math.sqrt(D))
    return pl.pallas_call(
        kernel,
        out_shape=jax.ShapeDtypeStruct((B, T, C), qkv.dtype),
        grid_spec=pltpu.PrefetchScalarGridSpec(
            num_scalar_prefetch=4,
            grid=(B, H, n_pairs),
            in_specs=[
                # q / k / v head slices straight out of the fused QKV tensor.
                pl.BlockSpec((None, tq, D),
                             lambda b, h, t, qi, kv, lf, mf: (b, qi[t], h)),
                pl.BlockSpec((None, tkv, D),
                             lambda b, h, t, qi, kv, lf, mf: (b, kv[t], H + h)),
                pl.BlockSpec((None, tkv, D),
                             lambda b, h, t, qi, kv, lf, mf: (b, kv[t], 2 * H + h)),
            ],
            out_specs=pl.BlockSpec((None, tq, D),
                                   lambda b, h, t, qi, kv, lf, mf: (b, qi[t], h)),
            scratch_shapes=scratch,
        ),
        compiler_params=cparams,
    )(qi_ids, kv_ids, last_flag, mask_flag, qkv, qkv, qkv)


def _flash_attention_headmajor(q, k, v, tq, tkv):
    """Fallback for D not a multiple of 128: q,k,v,(out) are (B, H, T, D)."""
    B, H, T, D = q.shape
    qi_ids, kv_ids, last_flag, mask_flag = _causal_worklist(T, tq, tkv)
    n_pairs = int(qi_ids.shape[0])
    kernel, scratch, cparams = _flash_common(tq, tkv, D, 1.0 / math.sqrt(D))
    return pl.pallas_call(
        kernel,
        out_shape=jax.ShapeDtypeStruct((B, H, T, D), q.dtype),
        grid_spec=pltpu.PrefetchScalarGridSpec(
            num_scalar_prefetch=4,
            grid=(B, H, n_pairs),
            in_specs=[
                pl.BlockSpec((None, None, tq, D),
                             lambda b, h, t, qi, kv, lf, mf: (b, h, qi[t], 0)),
                pl.BlockSpec((None, None, tkv, D),
                             lambda b, h, t, qi, kv, lf, mf: (b, h, kv[t], 0)),
                pl.BlockSpec((None, None, tkv, D),
                             lambda b, h, t, qi, kv, lf, mf: (b, h, kv[t], 0)),
            ],
            out_specs=pl.BlockSpec((None, None, tq, D),
                                   lambda b, h, t, qi, kv, lf, mf: (b, h, qi[t], 0)),
            scratch_shapes=scratch,
        ),
        compiler_params=cparams,
    )(qi_ids, kv_ids, last_flag, mask_flag, q, k, v)


# ---------------------------------------------------------------------------
# Full forward pass
# ---------------------------------------------------------------------------
def causal_self_attention(x, w_qkv_bf, b_qkv, w_proj_bf, b_proj, n_head):
    """x: (B, T, C) f32.  Weights pre-cast to bf16 (once, outside this call):
    w_qkv_bf: (C, 3C) bf16, b_qkv: (1, 3C) f32, w_proj_bf: (C, C) bf16,
    b_proj: (1, C) f32."""
    B, T, C = x.shape
    assert C % n_head == 0
    D = C // n_head

    x_bf = x.astype(jnp.bfloat16).reshape(B * T, C)

    # Phase 1: fused QKV projection (B folded into the row axis).
    qkv = _linear(x_bf, w_qkv_bf, b_qkv, out_dtype=jnp.bfloat16)
    qkv = qkv.reshape(B, T, 3 * C)

    # Attention tile sizes: 256 fills the 2x256^2 MXU on v6e/v7x; KV re-read
    # traffic scales with T/TQ.  Falls back to T for non-divisible toy sizes.
    tq = _pick_tile(T, (256, 128))
    tkv = _pick_tile(T, (256, 128))

    # Phase 2: causal flash attention over a lower-triangular tile work list.
    if D % 128 == 0:
        # Lane-aligned fast path: no head-split transposes, output written
        # directly in (B, T, C) layout for the projection.
        y = _flash_attention_fused(qkv, n_head, tq, tkv)          # (B, T, C)
    else:
        # TODO(synk): for D == 64, pack two adjacent heads into one 128-lane
        # tile per grid step instead of this head-major transpose fallback.
        def to_heads(m):
            return m.reshape(B, T, n_head, D).transpose(0, 2, 1, 3)
        qh = to_heads(qkv[..., 0 * C:1 * C])
        kh = to_heads(qkv[..., 1 * C:2 * C])
        vh = to_heads(qkv[..., 2 * C:3 * C])
        yh = _flash_attention_headmajor(qh, kh, vh, tq, tkv)      # (B, H, T, D)
        y = yh.transpose(0, 2, 1, 3).reshape(B, T, C)

    # Phase 3: output projection back to f32.
    out = _linear(y.reshape(B * T, C), w_proj_bf, b_proj, out_dtype=jnp.float32)
    return out.reshape(B, T, C)


# ---------------------------------------------------------------------------
# Pure-JAX reference (f32) for correctness checking
# ---------------------------------------------------------------------------
def reference(x, w_qkv, b_qkv, w_proj, b_proj, n_head):
    B, T, C = x.shape
    D = C // n_head
    qkv = x @ w_qkv + b_qkv[0]
    q, k, v = jnp.split(qkv, 3, axis=-1)
    q = q.reshape(B, T, n_head, D).transpose(0, 2, 1, 3)
    k = k.reshape(B, T, n_head, D).transpose(0, 2, 1, 3)
    v = v.reshape(B, T, n_head, D).transpose(0, 2, 1, 3)
    s = jnp.einsum("bhqd,bhkd->bhqk", q, k) / math.sqrt(D)
    mask = jnp.tril(jnp.ones((T, T), dtype=bool))
    s = jnp.where(mask, s, -jnp.inf)
    p = jax.nn.softmax(s, axis=-1)
    y = jnp.einsum("bhqk,bhkd->bhqd", p, v)
    y = y.transpose(0, 2, 1, 3).reshape(B, T, C)
    return y @ w_proj + b_proj[0]


if __name__ == "__main__":
    def run_case(B, T, C, H, atol, rtol):
        key = jax.random.PRNGKey(0)
        kx, k1, k2, k3, k4 = jax.random.split(key, 5)
        x = jax.random.normal(kx, (B, T, C), dtype=jnp.float32)
        # nn.Linear weights stored pre-transposed as (in_features, out_features).
        w_qkv = jax.random.normal(k1, (C, 3 * C), dtype=jnp.float32) * 0.02
        b_qkv = jax.random.normal(k2, (1, 3 * C), dtype=jnp.float32) * 0.02
        w_proj = jax.random.normal(k3, (C, C), dtype=jnp.float32) * 0.02
        b_proj = jax.random.normal(k4, (1, C), dtype=jnp.float32) * 0.02

        # Pre-cast weights to bf16 ONCE, outside the per-call path.
        w_qkv_bf = w_qkv.astype(jnp.bfloat16)
        w_proj_bf = w_proj.astype(jnp.bfloat16)

        out = causal_self_attention(x, w_qkv_bf, b_qkv, w_proj_bf, b_proj, H)
        out = jax.block_until_ready(out)
        assert out.shape == (B, T, C)

        # Reference uses the same (bf16-rounded) weights in f32 so the check
        # isolates kernel math from the deliberate bf16 weight policy.
        ref = reference(x, w_qkv_bf.astype(jnp.float32), b_qkv,
                        w_proj_bf.astype(jnp.float32), b_proj, H)
        max_err = float(jnp.max(jnp.abs(out - ref)))
        assert jnp.allclose(out, ref, atol=atol, rtol=rtol), (
            f"mismatch vs reference (B={B},T={T},C={C},H={H}), "
            f"max abs err {max_err}")

    # Toy config matching the module defaults (n_embd=32, n_head=4) -> D=8,
    # exercises the head-major fallback path with full-T blocks.
    run_case(2, 8, 32, 4, atol=1e-2, rtol=5e-2)
    # Lane-aligned config (D=128) -> fused fast path, 256-tiles, causal
    # work-list with both full (unmasked) and diagonal (masked) tiles.
    run_case(2, 512, 512, 4, atol=1e-2, rtol=5e-2)

    print("KERNEL_OK")
</pallas_src>

<mosaic_0001>
module attributes {stable_mosaic.version = 11 : i64} {
  func.func @_linear_kernel(%arg0: i32, %arg1: i32, %arg2: i32, %arg3: memref<16x32xbf16, #tpu.memory_space<vmem>>, %arg4: memref<32x96xbf16, #tpu.memory_space<vmem>>, %arg5: memref<1x96xf32, #tpu.memory_space<vmem>>, %arg6: memref<16x96xbf16, #tpu.memory_space<vmem>>, %arg7: memref<16x96xf32, #tpu.memory_space<vmem>>) attributes {dimension_semantics = [#tpu.dimension_semantics<parallel>, #tpu.dimension_semantics<parallel>, #tpu.dimension_semantics<arbitrary>], iteration_bounds = array<i64: 1, 1, 1>, scalar_prefetch = 0 : i64, scratch_operands = 1 : i64, tpu.core_type = #tpu.core_type<tc>, window_params = [{transform_indices = @transform_0, window_bounds = array<i64: 16, 32>}, {transform_indices = @transform_1, window_bounds = array<i64: 32, 96>}, {transform_indices = @transform_2, window_bounds = array<i64: 1, 96>}, {transform_indices = @transform_3, window_bounds = array<i64: 16, 96>}]} {
    %c0_i32 = arith.constant 0 : i32
    %0 = arith.cmpi eq, %arg2, %c0_i32 : i32
    %1 = arith.extui %0 : i1 to i32
    %c0_i32_0 = arith.constant 0 : i32
    %2 = arith.cmpi ne, %1, %c0_i32_0 : i32
    scf.if %2 {
      %cst_10 = arith.constant 0.000000e+00 : f32
      %12 = vector.broadcast %cst_10 : f32 to vector<16x96xf32>
      %c0_11 = arith.constant 0 : index
      %c0_12 = arith.constant 0 : index
      %13 = vector.load %arg7[%c0_11, %c0_12] : memref<16x96xf32, #tpu.memory_space<vmem>>, vector<16x96xf32>
      tpu.vector_store %arg7[%c0_11, %c0_12], %12 {strides = array<i32>} : memref<16x96xf32, #tpu.memory_space<vmem>>, vector<16x96xf32>,
    } else {
    }
    %c0 = arith.constant 0 : index
    %c0_1 = arith.constant 0 : index
    %3 = vector.load %arg7[%c0, %c0_1] : memref<16x96xf32, #tpu.memory_space<vmem>>, vector<16x96xf32>
    %c0_2 = arith.constant 0 : index
    %c0_3 = arith.constant 0 : index
    %4 = vector.load %arg3[%c0_2, %c0_3] : memref<16x32xbf16, #tpu.memory_space<vmem>>, vector<16x32xbf16>
    %c0_4 = arith.constant 0 : index
    %c0_5 = arith.constant 0 : index
    %5 = vector.load %arg4[%c0_4, %c0_5] : memref<32x96xbf16, #tpu.memory_space<vmem>>, vector<32x96xbf16>
    %cst = arith.constant dense<0.000000e+00> : vector<16x96xf32>
    %6 = tpu.matmul %4, %5, %cst {dimension_numbers = #tpu.dot_dimension_numbers<[1], [0], [0], [1], [0, 0, 1, 1], [], []>} : vector<16x32xbf16>, vector<32x96xbf16>, vector<16x96xf32> -> vector<16x96xf32>
    %7 = arith.addf %3, %6 : vector<16x96xf32>
    %c0_6 = arith.constant 0 : index
    %c0_7 = arith.constant 0 : index
    %8 = vector.load %arg7[%c0_6, %c0_7] : memref<16x96xf32, #tpu.memory_space<vmem>>, vector<16x96xf32>
    tpu.vector_store %arg7[%c0_6, %c0_7], %7 {strides = array<i32>} : memref<16x96xf32, #tpu.memory_space<vmem>>, vector<16x96xf32>,
    %c0_i32_8 = arith.constant 0 : i32
    %9 = arith.cmpi eq, %arg2, %c0_i32_8 : i32
    %10 = arith.extui %9 : i1 to i32
    %c0_i32_9 = arith.constant 0 : i32
    %11 = arith.cmpi ne, %10, %c0_i32_9 : i32
    scf.if %11 {
      %c0_10 = arith.constant 0 : index
      %c0_11 = arith.constant 0 : index
      %12 = vector.load %arg7[%c0_10, %c0_11] : memref<16x96xf32, #tpu.memory_space<vmem>>, vector<16x96xf32>
      %c0_12 = arith.constant 0 : index
      %c0_13 = arith.constant 0 : index
      %13 = vector.load %arg5[%c0_12, %c0_13] : memref<1x96xf32, #tpu.memory_space<vmem>>, vector<1x96xf32>
      %14 = vector.broadcast %13 : vector<1x96xf32> to vector<16x96xf32>
      %15 = arith.addf %12, %14 : vector<16x96xf32>
      %16 = arith.truncf %15 : vector<16x96xf32> to vector<16x96xbf16>
      %c0_14 = arith.constant 0 : index
      %c0_15 = arith.constant 0 : index
      %17 = vector.load %arg6[%c0_14, %c0_15] : memref<16x96xbf16, #tpu.memory_space<vmem>>, vector<16x96xbf16>
      tpu.vector_store %arg6[%c0_14, %c0_15], %16 {strides = array<i32>} : memref<16x96xbf16, #tpu.memory_space<vmem>>, vector<16x96xbf16>,
    } else {
    }
    return
  }
  func.func @transform_0(%arg0: i32, %arg1: i32, %arg2: i32) -> (i32, i32) {
    %c0_i32 = arith.constant 0 : i32
    return %arg0, %arg2 : i32, i32
  }
  func.func @transform_1(%arg0: i32, %arg1: i32, %arg2: i32) -> (i32, i32) {
    %c0_i32 = arith.constant 0 : i32
    return %arg2, %arg1 : i32, i32
  }
  func.func @transform_2(%arg0: i32, %arg1: i32, %arg2: i32) -> (i32, i32) {
    %c0_i32 = arith.constant 0 : i32
    %c0_i32_0 = arith.constant 0 : i32
    return %c0_i32, %arg1 : i32, i32
  }
  func.func @transform_3(%arg0: i32, %arg1: i32, %arg2: i32) -> (i32, i32) {
    %c0_i32 = arith.constant 0 : i32
    return %arg0, %arg1 : i32, i32
  }
}

</mosaic_0001>

<llo_original>
// kernel: tpu_custom_call.1
$region0: #{tpu_custom_call.1}
  #allocation0 [shape = 'u32[]', space=smem, size = 0x4, offset = 0x4, fixed_abs, tag = 'smem constant byte address 0x4 - core index']
  #allocation1 [shape = 'u32[72,128]{1,0:T(1,128)}', space=vmem, size = 0x9000, scoped, tag = 'internal scratch']
  #allocation2 [shape = 'f32[16,96]{1,0:T(8,128)}', space=vmem, size = 0x2000, scoped, tag = 'scratch operand']
  %s0 = inlined_call_operand.hbm [shape: bf16[16,32], index: 0, kind: input, shape index: {}]
  %s1 = inlined_call_operand.hbm [shape: bf16[32,96], index: 1, kind: input, shape index: {}]
  %s2 = inlined_call_operand.vmem [shape: f32[1,96], index: 2, kind: input, shape index: {}]
  %s3 = inlined_call_operand.hbm [shape: bf16[16,96], index: 3, kind: output, shape index: {}]
  %s4 = sld [smem:[#allocation0]]
  $region38: #{tpu_custom_call.1} parent=0
    _
  %s6 = ssub.s32 1, %s4
  %s7 = scalar_select 0, %s6, %s4
  $region1: #{tpu_custom_call.1} parent=0
    #allocation3 [shape = 'u8[4096]{0}', space=vmem, size = 0x1000, scoped, tag = 'input window, operand 0, single buffered']
    #allocation4 [shape = 's32[1]{0}', space=sflag, size = 0x4, scoped, tag = 'scoped memory for tpu_custom_call.1']
    #allocation5 [shape = 's32[1]{0}', space=sflag, size = 0x4, scoped, tag = 'scoped memory for tpu_custom_call.1']
    #allocation6 [shape = 'u8[8192]{0}', space=vmem, size = 0x2000, scoped, tag = 'input window, operand 1, single buffered']
    #allocation7 [shape = 's32[1]{0}', space=sflag, size = 0x4, scoped, tag = 'scoped memory for tpu_custom_call.1']
    #allocation8 [shape = 'u8[4096]{0}', space=vmem, size = 0x1000, scoped, tag = 'output window, operand 0, single buffered']
    %8 = vsyncpa [#allocation4], 0
    %9 = vsyncpa [#allocation7], 0
    %10 = vsyncpa [#allocation5], 0
    // Predicated region
    $region2: #{tpu_custom_call.1} parent=1 // pred_check
      _
    $region3: #{tpu_custom_call.1} parent=1 // pred_check_branch
      %12 = sbr.rel (0) target = $region5
    $region4: #{tpu_custom_call.1} parent=1 // pred_region
      %14 = vsyncadd [#allocation4], 0
      %s15 = sshll.u32 %s0, 4
      %s16 = int_to_ptr.hbm [resolvable:$true] %s15
      %s17 = sshll.u32 [#allocation3], 4
      %s18 = int_to_ptr.vmem [resolvable:$true] %s17
      %23 = dma.hbm_to_vmem [thread:$0]  %s16, 128, %s18, [#allocation4], 64, 64, 4
    $region5: #{tpu_custom_call.1} parent=1 // pred_fallthru
      _
    // Predicated region
    $region6: #{tpu_custom_call.1} parent=1 // pred_check
      _
    $region7: #{tpu_custom_call.1} parent=1 // pred_check_branch
      %25 = sbr.rel (0) target = $region9
    $region8: #{tpu_custom_call.1} parent=1 // pred_region
      %27 = vsyncadd [#allocation7], 0
      %s28 = sshll.u32 %s1, 4
      %s29 = int_to_ptr.hbm [resolvable:$true] %s28
      %s30 = sshll.u32 [#allocation6], 4
      %s31 = int_to_ptr.vmem [resolvable:$true] %s30
      %36 = dma.hbm_to_vmem [thread:$0]  %s29, 256, %s31, [#allocation7], 64, 64, 4
    $region9: #{tpu_custom_call.1} parent=1 // pred_fallthru
      _
    // Predicated region
    $region10: #{tpu_custom_call.1} parent=1 // pred_check
      _
    $region11: #{tpu_custom_call.1} parent=1 // pred_check_branch
      %38 = sbr.rel (0) target = $region13
    $region12: #{tpu_custom_call.1} parent=1 // pred_region
      _
    $region13: #{tpu_custom_call.1} parent=1 // pred_fallthru
      _
    // Predicated region
    $region14: #{tpu_custom_call.1} parent=1 // pred_check
      _
    $region15: #{tpu_custom_call.1} parent=1 // pred_check_branch
      %40 = sbr.rel (0) target = $region17
    $region16: #{tpu_custom_call.1} parent=1 // pred_region
      %42 = dma.done [#allocation4], 128
    $region17: #{tpu_custom_call.1} parent=1 // pred_fallthru
      _
    // Predicated region
    $region18: #{tpu_custom_call.1} parent=1 // pred_check
      _
    $region19: #{tpu_custom_call.1} parent=1 // pred_check_branch
      %44 = sbr.rel (0) target = $region21
    $region20: #{tpu_custom_call.1} parent=1 // pred_region
      %46 = dma.done [#allocation7], 256
    $region21: #{tpu_custom_call.1} parent=1 // pred_fallthru
      _
    %p48 = scmp.eq.s32.totalorder 0, 0
    // Predicated region
    $region22: #{tpu_custom_call.1} parent=1 // pred_check
      %p49 = pneg %p48
    $region23: #{tpu_custom_call.1} parent=1 // pred_check_branch
      %51 = sbr.rel (%p49) target = $region25
    $region24: #{tpu_custom_call.1} parent=1 // pred_region
      %vm52 = vcmask 785408
      %53 = vst.msk [vmem:[#allocation2] sm:$0xff] %vm52, 0.0
      %54 = vst.msk [vmem:[#allocation2 + $0x8] sm:$0xff] %vm52, 0.0
    $region25: #{tpu_custom_call.1} parent=1 // pred_fallthru
      _
    %v55 = vld [vmem:[#allocation2] sm:$0xff]
    %v56 = vld [vmem:[#allocation2 + $0x8] sm:$0xff]
    %v57 = vld [vmem:[#allocation3] sm:$0xf]
    %v58 = vld [vmem:[#allocation3 + $0x4] sm:$0xf]
    %v59 = vld [vmem:[#allocation6] sm:$0xf]
    %v60 = vld [vmem:[#allocation6 + $0x4] sm:$0xf]
    %v61 = vld [vmem:[#allocation6 + $0x8] sm:$0xf]
    %v62 = vld [vmem:[#allocation6 + $0xc] sm:$0xf]
    %v65 = vunpack.c.l.b16 %v57
    %v66 = vunpack.c.l.b16 %v58
    %v67 = vpack.c.b16 %v66, %v65
    %v72 = vunpack.c.l.b16 %v59
    %v73 = vunpack.c.l.b16 %v60
    %v74 = vunpack.c.l.b16 %v61
    %v75 = vunpack.c.l.b16 %v62
    %v76 = vpack.c.b16 %v73, %v72
    %v77 = vpack.c.b16 %v75, %v74
    %vm80 = vcmask 261120
    %v82 = vsel %vm80, %v67, 0
    %84 = vmatpush.bf16.msra.mxu0 0
    %85 = vmatpush.bf16.msra.mxu0 0
    %86 = vmatpush.bf16.msra.mxu0 0
    %87 = vmatpush.bf16.msra.mxu0 0
    %88 = vmatpush.bf16.msra.mxu0 0
    %89 = vmatpush.bf16.msra.mxu0 0
    %90 = vmatpush.bf16.msra.mxu0 %v77
    %91 = vmatpush.bf16.msra.mxu0 %v76
    %92 = vmatmul.bf16.gmra.mxu0 %v82
    %v93 = vpop.f32.mrf.mxu0
    %v94 = vadd.f32 0.0, %v93
    %v95 = vpop.f32.mrf.mxu0
    %v96 = vadd.f32 0.0, %v95
    %97 = vdwg.mxu0
    %v98 = vadd.f32 %v55, %v94
    %v99 = vadd.f32 %v56, %v96
    %vm100 = vcmask 785408
    %101 = vst.msk [vmem:[#allocation2] sm:$0xff] %vm100, %v98
    %102 = vst.msk [vmem:[#allocation2 + $0x8] sm:$0xff] %vm100, %v99
    // Predicated region
    $region26: #{tpu_custom_call.1} parent=1 // pred_check
      %p103 = pneg %p48
    $region27: #{tpu_custom_call.1} parent=1 // pred_check_branch
      %105 = sbr.rel (%p103) target = $region29
    $region28: #{tpu_custom_call.1} parent=1 // pred_region
      %v106 = vld [vmem:[#allocation2] sm:$0xff]
      %v107 = vld [vmem:[#allocation2 + $0x8] sm:$0xff]
      %v108 = vld [vmem:[%s2] sm:$0x1]
      %v110 = vperm.slane %v108, 0
      %v112 = vadd.f32 %v106, %v110
      %v113 = vadd.f32 %v107, %v110
      %v114 = vpack.c.bf16 %v112, %v112
      %v115 = vpack.c.bf16 %v113, %v113
      %vm116 = vcmask 781312
      %117 = vst.msk [vmem:[#allocation8] sm:$0xf] %vm116, %v114
      %118 = vst.msk [vmem:[#allocation8 + $0x4] sm:$0xf] %vm116, %v115
    $region29: #{tpu_custom_call.1} parent=1 // pred_fallthru
      _
    // Predicated region
    $region30: #{tpu_custom_call.1} parent=1 // pred_check
      _
    $region31: #{tpu_custom_call.1} parent=1 // pred_check_branch
      %120 = sbr.rel (0) target = $region33
    $region32: #{tpu_custom_call.1} parent=1 // pred_region
      %122 = vsyncadd [#allocation5], 0
      %s123 = sshll.u32 [#allocation8], 4
      %s124 = int_to_ptr.vmem [resolvable:$true] %s123
      %s125 = sshll.u32 %s3, 4
      %s126 = int_to_ptr.hbm [resolvable:$true] %s125
      %131 = dma.vmem_to_hbm [thread:$0]  %s124, 128, %s126, [#allocation5], 64, 64, 4
    $region33: #{tpu_custom_call.1} parent=1 // pred_fallthru
      _
    // Predicated region
    $region34: #{tpu_custom_call.1} parent=1 // pred_check
      _
    $region35: #{tpu_custom_call.1} parent=1 // pred_check_branch
      %133 = sbr.rel (0) target = $region37
    $region36: #{tpu_custom_call.1} parent=1 // pred_region
      %135 = dma.done [#allocation5], 128
    $region37: #{tpu_custom_call.1} parent=1 // pred_fallthru
      _
    %136 = vsyncpa [#allocation4], 1
    %137 = vsyncpa [#allocation7], 1
    %138 = vsyncpa [#allocation5], 1

</llo_original>
